<compile_context>
chip_gen: v7x
topology: tpu7x:2x2x1
jax: 0.10.0
libtpu: 0.0.40
codegen_flags: <defaults>
</compile_context>

<pallas_src>
import jax
import jax.numpy as jnp
from jax.experimental import pallas as pl
from jax.experimental.pallas import tpu as pltpu

_LANE = 128
_SUBLANE = 8
_MiB = 1024 * 1024


def _round_up(x, m):
    return ((x + m - 1) // m) * m


# ----------------------------------------------------------------------------
# Kernel body: one batch tile. x is cast to bf16 in-VMEM (VPU cast, hidden
# behind the DMA/MXU), matmul accumulates in f32 on the MXU, bias add in f32.
# ----------------------------------------------------------------------------
def _head_kernel(x_ref, w_ref, b_ref, o_ref):
    # x_ref: (tm, H) input dtype | w_ref: (H, n_pad) bf16
    # b_ref: (1, n_pad) f32      | o_ref: (tm, n_pad) f32
    x = x_ref[...].astype(jnp.bfloat16)
    logits = jnp.dot(x, w_ref[...], preferred_element_type=jnp.float32)
    o_ref[...] = (logits + b_ref[...]).astype(o_ref.dtype)


# ----------------------------------------------------------------------------
# Generation-aware VMEM configuration.
# ----------------------------------------------------------------------------
def _tpu_vmem_config():
    """Returns (vmem_limit_bytes, tm_cap)."""
    try:
        cap = int(pltpu.get_tpu_info().vmem_capacity_bytes)
    except Exception:
        cap = 64 * _MiB  # conservative fallback (safe on every generation)
    if cap >= 128 * _MiB:           # v5e / v6e: spend the VMEM we have
        return 100 * _MiB, 1024
    return 44 * _MiB, 512           # v7x: 64 MiB physical per TensorCore


def _pick_tm(B, H, n_pad, x_itemsize, budget_bytes, tm_cap):
    """Batch tile: >=4 grid steps when possible (v7x megacore), last tile
    nearly full, and pipeline buffers within the VMEM budget."""
    n_blocks = max(4, pl.cdiv(B, tm_cap))
    tm = _round_up(max(pl.cdiv(B, n_blocks), _SUBLANE), _SUBLANE)
    tm = min(tm, tm_cap, _round_up(B, _SUBLANE))

    resident = 2 * (H * n_pad * 2 + n_pad * 4)   # weight+bias, worst-case 2 bufs

    def fits(t):
        x_bytes = 2 * t * H * x_itemsize          # double-buffered activations
        o_bytes = 2 * t * n_pad * 4               # double-buffered f32 outputs
        return resident + x_bytes + o_bytes <= budget_bytes

    while tm > _SUBLANE and not fits(tm):
        tm = max(_SUBLANE, _round_up(tm // 2, _SUBLANE))
    return tm


# ----------------------------------------------------------------------------
# One-time parameter prepack (do this at model init, not per call).
# ----------------------------------------------------------------------------
def prepack_head_params(weight, bias):
    """weight: [N, H] (PyTorch layout), bias: [N]
       -> (w_packed [H, n_pad] bf16, b_packed [1, n_pad] f32), n_pad = 128-multiple."""
    N, H = weight.shape
    n_pad = _round_up(max(N, _LANE), _LANE)
    w_packed = jnp.zeros((H, n_pad), jnp.bfloat16).at[:, :N].set(
        weight.T.astype(jnp.bfloat16))
    b_packed = jnp.zeros((1, n_pad), jnp.float32).at[0, :N].set(
        bias.astype(jnp.float32))
    return w_packed, b_packed


# ----------------------------------------------------------------------------
# Forward pass.
# ----------------------------------------------------------------------------
def sequence_classification_head(pooled_output, w_packed, b_packed, num_labels,
                                 *, return_padded=False):
    """pooled_output: [B, H] (f32 or bf16), prepacked params -> logits [B, num_labels] f32.

    Dropout is identity at inference and therefore omitted.
    """
    B, H = pooled_output.shape
    Hw, n_pad = w_packed.shape
    assert H == Hw and num_labels <= n_pad

    vmem_limit, tm_cap = _tpu_vmem_config()
    x_itemsize = jnp.dtype(pooled_output.dtype).itemsize
    tm = _pick_tm(B, H, n_pad, x_itemsize, vmem_limit - 4 * _MiB, tm_cap)
    grid_b = pl.cdiv(B, tm)   # ragged last block handled by Pallas; no zero-padding DMA

    cost = pl.CostEstimate(
        flops=2 * B * H * n_pad,
        transcendentals=0,
        bytes_accessed=B * H * x_itemsize + H * n_pad * 2 + n_pad * 4 + B * n_pad * 4,
    )

    # Note: for the grid_b == 1 case on v5e one could add an "arbitrary" K axis
    # over H with an f32 accumulator to overlap DMA and MXU; omitted here since
    # classification heads are tiny and grid_b >= 4 for any non-trivial batch.
    def run(resident_mode):
        kw = {} if resident_mode is None else dict(pipeline_mode=resident_mode)
        grid_spec = pltpu.PrefetchScalarGridSpec(
            num_scalar_prefetch=0,
            grid=(grid_b,),
            in_specs=[
                pl.BlockSpec((tm, H), lambda i: (i, 0)),            # pipelined activations
                pl.BlockSpec((H, n_pad), lambda i: (0, 0), **kw),   # resident weight
                pl.BlockSpec((1, n_pad), lambda i: (0, 0), **kw),   # resident bias
            ],
            out_specs=pl.BlockSpec((tm, n_pad), lambda i: (i, 0)),
        )
        return pl.pallas_call(
            _head_kernel,
            out_shape=jax.ShapeDtypeStruct((B, n_pad), jnp.float32),
            grid_spec=grid_spec,
            compiler_params=pltpu.CompilerParams(
                dimension_semantics=("parallel",),
                vmem_limit_bytes=vmem_limit,
            ),
            cost_estimate=cost,
        )(pooled_output, w_packed, b_packed)

    try:
        out = run(pl.Buffered(1))      # single-buffer grid-invariant operands
    except Exception:
        out = run(None)                # fall back to default double-buffering

    if return_padded:
        return out                     # padded columns are exact zeros
    return out[:, :num_labels]


if __name__ == "__main__":
    # Small, module-consistent shapes: batch=8, hidden_size=32, num_labels=8.
    B, H, N = 8, 32, 8

    key = jax.random.PRNGKey(0)
    k_x, k_w = jax.random.split(key)

    # Deterministic init mirroring _init_weights():
    #   classifier.weight ~ Normal(0, 0.02), classifier.bias = 0
    weight = 0.02 * jax.random.normal(k_w, (N, H), dtype=jnp.float32)  # PyTorch [out, in]
    bias = jnp.zeros((N,), dtype=jnp.float32)
    pooled_output = jax.random.normal(k_x, (B, H), dtype=jnp.float32)

    # Prepack once (model-init time), then run the head.
    w_packed, b_packed = prepack_head_params(weight, bias)
    w_packed, b_packed = jax.block_until_ready((w_packed, b_packed))

    logits = sequence_classification_head(pooled_output, w_packed, b_packed, N)
    logits = jax.block_until_ready(logits)

    # Reference (dropout is identity in eval mode). bf16 operands -> loose tol.
    ref = pooled_output @ weight.T + bias
    assert logits.shape == (B, N)
    assert jnp.allclose(logits, ref, atol=1e-2, rtol=1e-2), \
        float(jnp.max(jnp.abs(logits - ref)))

    print("KERNEL_OK")
</pallas_src>

<mosaic_0001>
module attributes {stable_mosaic.version = 11 : i64} {
  func.func @_head_kernel(%arg0: i32, %arg1: memref<8x32xf32, #tpu.memory_space<vmem>>, %arg2: memref<32x128xbf16, #tpu.memory_space<vmem>>, %arg3: memref<1x128xf32, #tpu.memory_space<vmem>>, %arg4: memref<8x128xf32, #tpu.memory_space<vmem>>) attributes {dimension_semantics = [#tpu.dimension_semantics<parallel>], iteration_bounds = array<i64: 1>, scalar_prefetch = 0 : i64, scratch_operands = 0 : i64, tpu.core_type = #tpu.core_type<tc>, window_params = [{transform_indices = @transform_0, window_bounds = array<i64: 8, 32>}, {pipeline_mode = #tpu.pipeline_mode<synchronous>, transform_indices = @transform_1, window_bounds = array<i64: 32, 128>}, {pipeline_mode = #tpu.pipeline_mode<synchronous>, transform_indices = @transform_2, window_bounds = array<i64: 1, 128>}, {transform_indices = @transform_3, window_bounds = array<i64: 8, 128>}]} {
    %c0 = arith.constant 0 : index
    %c0_0 = arith.constant 0 : index
    %0 = vector.load %arg1[%c0, %c0_0] : memref<8x32xf32, #tpu.memory_space<vmem>>, vector<8x32xf32>
    %1 = arith.truncf %0 : vector<8x32xf32> to vector<8x32xbf16>
    %c0_1 = arith.constant 0 : index
    %c0_2 = arith.constant 0 : index
    %2 = vector.load %arg2[%c0_1, %c0_2] : memref<32x128xbf16, #tpu.memory_space<vmem>>, vector<32x128xbf16>
    %cst = arith.constant dense<0.000000e+00> : vector<8x128xf32>
    %3 = tpu.matmul %1, %2, %cst {dimension_numbers = #tpu.dot_dimension_numbers<[1], [0], [0], [1], [0, 0, 1, 1], [], []>} : vector<8x32xbf16>, vector<32x128xbf16>, vector<8x128xf32> -> vector<8x128xf32>
    %c0_3 = arith.constant 0 : index
    %c0_4 = arith.constant 0 : index
    %4 = vector.load %arg3[%c0_3, %c0_4] : memref<1x128xf32, #tpu.memory_space<vmem>>, vector<1x128xf32>
    %5 = vector.broadcast %4 : vector<1x128xf32> to vector<8x128xf32>
    %6 = arith.addf %3, %5 : vector<8x128xf32>
    %c0_5 = arith.constant 0 : index
    %c0_6 = arith.constant 0 : index
    %7 = vector.load %arg4[%c0_5, %c0_6] : memref<8x128xf32, #tpu.memory_space<vmem>>, vector<8x128xf32>
    tpu.vector_store %arg4[%c0_5, %c0_6], %6 {strides = array<i32>} : memref<8x128xf32, #tpu.memory_space<vmem>>, vector<8x128xf32>,
    return
  }
  func.func @transform_0(%arg0: i32) -> (i32, i32) {
    %c0_i32 = arith.constant 0 : i32
    %c0_i32_0 = arith.constant 0 : i32
    return %arg0, %c0_i32 : i32, i32
  }
  func.func @transform_1(%arg0: i32) -> (i32, i32) {
    %c0_i32 = arith.constant 0 : i32
    %c0_i32_0 = arith.constant 0 : i32
    %c0_i32_1 = arith.constant 0 : i32
    return %c0_i32, %c0_i32_0 : i32, i32
  }
  func.func @transform_2(%arg0: i32) -> (i32, i32) {
    %c0_i32 = arith.constant 0 : i32
    %c0_i32_0 = arith.constant 0 : i32
    %c0_i32_1 = arith.constant 0 : i32
    return %c0_i32, %c0_i32_0 : i32, i32
  }
  func.func @transform_3(%arg0: i32) -> (i32, i32) {
    %c0_i32 = arith.constant 0 : i32
    %c0_i32_0 = arith.constant 0 : i32
    return %arg0, %c0_i32 : i32, i32
  }
}

module attributes {stable_mosaic.version = 11 : i64} {
  func.func @_head_kernel(%arg0: i32, %arg1: memref<8x32xf32, #tpu.memory_space<vmem>>, %arg2: memref<32x128xbf16, #tpu.memory_space<vmem>>, %arg3: memref<1x128xf32, #tpu.memory_space<vmem>>, %arg4: memref<8x128xf32, #tpu.memory_space<vmem>>) attributes {dimension_semantics = [#tpu.dimension_semantics<parallel>], iteration_bounds = array<i64: 1>, scalar_prefetch = 0 : i64, scratch_operands = 0 : i64, tpu.core_type = #tpu.core_type<tc>, window_params = [{transform_indices = @transform_0, window_bounds = array<i64: 8, 32>}, {pipeline_mode = #tpu.pipeline_mode<synchronous>, transform_indices = @transform_1, window_bounds = array<i64: 32, 128>}, {pipeline_mode = #tpu.pipeline_mode<synchronous>, transform_indices = @transform_2, window_bounds = array<i64: 1, 128>}, {transform_indices = @transform_3, window_bounds = array<i64: 8, 128>}]} {
    %c0 = arith.constant 0 : index
    %c0_0 = arith.constant 0 : index
    %0 = vector.load %arg1[%c0, %c0_0] : memref<8x32xf32, #tpu.memory_space<vmem>>, vector<8x32xf32>
    %1 = arith.truncf %0 : vector<8x32xf32> to vector<8x32xbf16>
    %c0_1 = arith.constant 0 : index
    %c0_2 = arith.constant 0 : index
    %2 = vector.load %arg2[%c0_1, %c0_2] : memref<32x128xbf16, #tpu.memory_space<vmem>>, vector<32x128xbf16>
    %cst = arith.constant dense<0.000000e+00> : vector<8x128xf32>
    %3 = tpu.matmul %1, %2, %cst {dimension_numbers = #tpu.dot_dimension_numbers<[1], [0], [0], [1], [0, 0, 1, 1], [], []>} : vector<8x32xbf16>, vector<32x128xbf16>, vector<8x128xf32> -> vector<8x128xf32>
    %c0_3 = arith.constant 0 : index
    %c0_4 = arith.constant 0 : index
    %4 = vector.load %arg3[%c0_3, %c0_4] : memref<1x128xf32, #tpu.memory_space<vmem>>, vector<1x128xf32>
    %5 = vector.broadcast %4 : vector<1x128xf32> to vector<8x128xf32>
    %6 = arith.addf %3, %5 : vector<8x128xf32>
    %c0_5 = arith.constant 0 : index
    %c0_6 = arith.constant 0 : index
    %7 = vector.load %arg4[%c0_5, %c0_6] : memref<8x128xf32, #tpu.memory_space<vmem>>, vector<8x128xf32>
    tpu.vector_store %arg4[%c0_5, %c0_6], %6 {strides = array<i32>} : memref<8x128xf32, #tpu.memory_space<vmem>>, vector<8x128xf32>,
    return
  }
  func.func @transform_0(%arg0: i32) -> (i32, i32) {
    %c0_i32 = arith.constant 0 : i32
    %c0_i32_0 = arith.constant 0 : i32
    return %arg0, %c0_i32 : i32, i32
  }
  func.func @transform_1(%arg0: i32) -> (i32, i32) {
    %c0_i32 = arith.constant 0 : i32
    %c0_i32_0 = arith.constant 0 : i32
    %c0_i32_1 = arith.constant 0 : i32
    return %c0_i32, %c0_i32_0 : i32, i32
  }
  func.func @transform_2(%arg0: i32) -> (i32, i32) {
    %c0_i32 = arith.constant 0 : i32
    %c0_i32_0 = arith.constant 0 : i32
    %c0_i32_1 = arith.constant 0 : i32
    return %c0_i32, %c0_i32_0 : i32, i32
  }
  func.func @transform_3(%arg0: i32) -> (i32, i32) {
    %c0_i32 = arith.constant 0 : i32
    %c0_i32_0 = arith.constant 0 : i32
    return %arg0, %c0_i32 : i32, i32
  }
}

</mosaic_0001>

<llo_original>
// kernel: tpu_custom_call.1
$region0: #{tpu_custom_call.1}
  #allocation0 [shape = 'u32[]', space=smem, size = 0x4, offset = 0x4, fixed_abs, tag = 'smem constant byte address 0x4 - core index']
  #allocation1 [shape = 'u32[144,128]{1,0:T(1,128)}', space=vmem, size = 0x12000, scoped, tag = 'internal scratch']
  %s0 = inlined_call_operand.hbm [shape: f32[8,32], index: 0, kind: input, shape index: {}]
  %s1 = inlined_call_operand.hbm [shape: bf16[32,128], index: 1, kind: input, shape index: {}]
  %s2 = inlined_call_operand.vmem [shape: f32[1,128], index: 2, kind: input, shape index: {}]
  %s3 = inlined_call_operand.hbm [shape: f32[8,128], index: 3, kind: output, shape index: {}]
  %s4 = sld [smem:[#allocation0]]
  $region30: #{tpu_custom_call.1} parent=0
    _
  %s6 = ssub.s32 1, %s4
  %s7 = scalar_select 0, %s6, %s4
  $region1: #{tpu_custom_call.1} parent=0
    #allocation2 [shape = 'u8[4096]{0}', space=vmem, size = 0x1000, scoped, tag = 'input window, operand 0, single buffered']
    #allocation3 [shape = 's32[1]{0}', space=sflag, size = 0x4, scoped, tag = 'scoped memory for tpu_custom_call.1']
    #allocation4 [shape = 's32[1]{0}', space=sflag, size = 0x4, scoped, tag = 'scoped memory for tpu_custom_call.1']
    #allocation5 [shape = 'u8[8192]{0}', space=vmem, size = 0x2000, scoped, tag = 'input window, operand 1, single buffered']
    #allocation6 [shape = 's32[1]{0}', space=sflag, size = 0x4, scoped, tag = 'scoped memory for tpu_custom_call.1']
    #allocation7 [shape = 'u8[4096]{0}', space=vmem, size = 0x1000, scoped, tag = 'output window, operand 0, single buffered']
    %8 = vsyncpa [#allocation3], 0
    %9 = vsyncpa [#allocation6], 0
    %10 = vsyncpa [#allocation4], 0
    // Predicated region
    $region2: #{tpu_custom_call.1} parent=1 // pred_check
      _
    $region3: #{tpu_custom_call.1} parent=1 // pred_check_branch
      %12 = sbr.rel (0) target = $region5
    $region4: #{tpu_custom_call.1} parent=1 // pred_region
      %s14 = ssub.s32 128, 128
      %15 = vsyncadd [#allocation3], %s14
      %s17 = sshll.u32 [#allocation2], 4
      %s18 = int_to_ptr.vmem [resolvable:$true] %s17
      %20 = dma.hbm_to_vmem [thread:$0]  %s0, 128, %s18, [#allocation3]
    $region5: #{tpu_custom_call.1} parent=1 // pred_fallthru
      _
    // Predicated region
    $region6: #{tpu_custom_call.1} parent=1 // pred_check
      _
    $region7: #{tpu_custom_call.1} parent=1 // pred_check_branch
      %22 = sbr.rel (0) target = $region9
    $region8: #{tpu_custom_call.1} parent=1 // pred_region
      %s24 = ssub.s32 256, 256
      %25 = vsyncadd [#allocation6], %s24
      %s26 = sshll.u32 [#allocation5], 4
      %s27 = int_to_ptr.vmem [resolvable:$true] %s26
      %32 = dma.hbm_to_vmem [thread:$0]  %s1, 256, %s27, [#allocation6], 64, 64, 4
    $region9: #{tpu_custom_call.1} parent=1 // pred_fallthru
      _
    // Predicated region
    $region10: #{tpu_custom_call.1} parent=1 // pred_check
      _
    $region11: #{tpu_custom_call.1} parent=1 // pred_check_branch
      %34 = sbr.rel (0) target = $region13
    $region12: #{tpu_custom_call.1} parent=1 // pred_region
      _
    $region13: #{tpu_custom_call.1} parent=1 // pred_fallthru
      _
    // Predicated region
    $region14: #{tpu_custom_call.1} parent=1 // pred_check
      _
    $region15: #{tpu_custom_call.1} parent=1 // pred_check_branch
      %36 = sbr.rel (0) target = $region17
    $region16: #{tpu_custom_call.1} parent=1 // pred_region
      %37 = dma.done [#allocation3], 128
    $region17: #{tpu_custom_call.1} parent=1 // pred_fallthru
      _
    // Predicated region
    $region18: #{tpu_custom_call.1} parent=1 // pred_check
      _
    $region19: #{tpu_custom_call.1} parent=1 // pred_check_branch
      %39 = sbr.rel (0) target = $region21
    $region20: #{tpu_custom_call.1} parent=1 // pred_region
      %40 = dma.done [#allocation6], 256
    $region21: #{tpu_custom_call.1} parent=1 // pred_fallthru
      _
    %v42 = vld [vmem:[#allocation2] sm:$0xff]
    %v43 = vpack.c.bf16 %v42, %v42
    %v44 = vld [vmem:[#allocation5] sm:$0xf]
    %v45 = vld [vmem:[#allocation5 + $0x4] sm:$0xf]
    %v46 = vld [vmem:[#allocation5 + $0x8] sm:$0xf]
    %v47 = vld [vmem:[#allocation5 + $0xc] sm:$0xf]
    %v48 = vld [vmem:[%s2] sm:$0x1]
    %v50 = vlaneseq
    %v51 = vshrl.u32 %v50, 7
    %v52 = vsub.s32 0, %v51
    %v53 = vrot.slane %v48, %v52
    %v59 = vunpack.c.l.b16 %v44
    %v60 = vunpack.c.l.b16 %v45
    %v61 = vunpack.c.l.b16 %v46
    %v62 = vunpack.c.l.b16 %v47
    %v63 = vpack.c.b16 %v60, %v59
    %v64 = vpack.c.b16 %v62, %v61
    %vm67 = vcmask 261120
    %v69 = vsel %vm67, %v43, 0
    %71 = vmatprep.subr.bf16.mxu0 0
    %72 = vmatpush1.bf16.msra.mxu0 %v63
    %73 = vmatprep.subr.bf16.mxu0 0
    %74 = vmatpush1.bf16.msra.mxu0 %v64
    %75 = vmatprep.subr.bf16.mxu0 0
    %76 = vmatpush1.bf16.msra.mxu0 0
    %77 = vmatprep.subr.bf16.mxu0 0
    %78 = vmatpush1.bf16.msra.mxu0 0
    %79 = vmatprep.subr.bf16.mxu0 0
    %80 = vmatpush1.bf16.msra.mxu0 0
    %81 = vmatprep.subr.bf16.mxu0 0
    %82 = vmatpush1.bf16.msra.mxu0 0
    %83 = vmatprep.subr.bf16.mxu0 0
    %84 = vmatpush1.bf16.msra.mxu0 0
    %85 = vmatprep.subr.bf16.mxu0 0
    %86 = vmatpush1.bf16.msra.mxu0 0
    %87 = vmatprep.subr.bf16.mxu0 0
    %88 = vmatpush1.bf16.msra.mxu0 0
    %89 = vmatprep.subr.bf16.mxu0 0
    %90 = vmatpush1.bf16.msra.mxu0 0
    %91 = vmatprep.subr.bf16.mxu0 0
    %92 = vmatpush1.bf16.msra.mxu0 0
    %93 = vmatprep.subr.bf16.mxu0 0
    %94 = vmatpush1.bf16.msra.mxu0 0
    %95 = vmatprep.subr.bf16.mxu0 0
    %96 = vmatpush1.bf16.msra.mxu0 0
    %97 = vmatprep.subr.bf16.mxu0 0
    %98 = vmatpush1.bf16.msra.mxu0 0
    %99 = vmatprep.subr.bf16.mxu0 0
    %100 = vmatpush1.bf16.msra.mxu0 0
    %101 = vmatprep.subr.bf16.mxu0 0
    %102 = vmatpush1.bf16.msra.mxu0 0
    %103 = vmatprep.mubr.bf16.mxu0 0
    %104 = vmatmul.mubr.bf16.gmra.mrb[0].mxu0 %v69
    %v105 = vpop.f32.mrb[0].mxu0
    %v106 = vadd.f32 %v53, %v105
    %v107 = vpop.f32.mrb[0].mxu0
    %v108 = vpop.f32.mrb[0].mxu0
    %v109 = vpop.f32.mrb[0].mxu0
    %110 = vdwg.mxu0
    %111 = vst [vmem:[#allocation7] sm:$0xff] %v106
    // Predicated region
    $region22: #{tpu_custom_call.1} parent=1 // pred_check
      _
    $region23: #{tpu_custom_call.1} parent=1 // pred_check_branch
      %113 = sbr.rel (0) target = $region25
    $region24: #{tpu_custom_call.1} parent=1 // pred_region
      %s115 = ssub.s32 128, 128
      %116 = vsyncadd [#allocation4], %s115
      %s118 = sshll.u32 [#allocation7], 4
      %s119 = int_to_ptr.vmem [resolvable:$true] %s118
      %121 = dma.vmem_to_hbm [thread:$0]  %s119, 128, %s3, [#allocation4]
    $region25: #{tpu_custom_call.1} parent=1 // pred_fallthru
      _
    // Predicated region
    $region26: #{tpu_custom_call.1} parent=1 // pred_check
      _
    $region27: #{tpu_custom_call.1} parent=1 // pred_check_branch
      %123 = sbr.rel (0) target = $region29
    $region28: #{tpu_custom_call.1} parent=1 // pred_region
      %124 = dma.done [#allocation4], 128
    $region29: #{tpu_custom_call.1} parent=1 // pred_fallthru
      _
    %125 = vsyncpa [#allocation3], 1
    %126 = vsyncpa [#allocation6], 1
    %127 = vsyncpa [#allocation4], 1

// kernel: tpu_custom_call.1
$region0: #{tpu_custom_call.1}
  #allocation0 [shape = 'u32[]', space=smem, size = 0x4, offset = 0x4, fixed_abs, tag = 'smem constant byte address 0x4 - core index']
  #allocation1 [shape = 'u32[144,128]{1,0:T(1,128)}', space=vmem, size = 0x12000, scoped, tag = 'internal scratch']
  %s0 = inlined_call_operand.hbm [shape: f32[8,32], index: 0, kind: input, shape index: {}]
  %s1 = inlined_call_operand.hbm [shape: bf16[32,128], index: 1, kind: input, shape index: {}]
  %s2 = inlined_call_operand.vmem [shape: f32[1,128], index: 2, kind: input, shape index: {}]
  %s3 = inlined_call_operand.hbm [shape: f32[8,128], index: 3, kind: output, shape index: {}]
  %s4 = sld [smem:[#allocation0]]
  $region30: #{tpu_custom_call.1} parent=0
    _
  %s6 = ssub.s32 1, %s4
  %s7 = scalar_select 0, %s6, %s4
  $region1: #{tpu_custom_call.1} parent=0
    #allocation2 [shape = 'u8[4096]{0}', space=vmem, size = 0x1000, scoped, tag = 'input window, operand 0, single buffered']
    #allocation3 [shape = 's32[1]{0}', space=sflag, size = 0x4, scoped, tag = 'scoped memory for tpu_custom_call.1']
    #allocation4 [shape = 's32[1]{0}', space=sflag, size = 0x4, scoped, tag = 'scoped memory for tpu_custom_call.1']
    #allocation5 [shape = 'u8[8192]{0}', space=vmem, size = 0x2000, scoped, tag = 'input window, operand 1, single buffered']
    #allocation6 [shape = 's32[1]{0}', space=sflag, size = 0x4, scoped, tag = 'scoped memory for tpu_custom_call.1']
    #allocation7 [shape = 'u8[4096]{0}', space=vmem, size = 0x1000, scoped, tag = 'output window, operand 0, single buffered']
    %8 = vsyncpa [#allocation3], 0
    %9 = vsyncpa [#allocation6], 0
    %10 = vsyncpa [#allocation4], 0
    // Predicated region
    $region2: #{tpu_custom_call.1} parent=1 // pred_check
      _
    $region3: #{tpu_custom_call.1} parent=1 // pred_check_branch
      %12 = sbr.rel (0) target = $region5
    $region4: #{tpu_custom_call.1} parent=1 // pred_region
      %s14 = ssub.s32 128, 128
      %15 = vsyncadd [#allocation3], %s14
      %s17 = sshll.u32 [#allocation2], 4
      %s18 = int_to_ptr.vmem [resolvable:$true] %s17
      %20 = dma.hbm_to_vmem [thread:$0]  %s0, 128, %s18, [#allocation3]
    $region5: #{tpu_custom_call.1} parent=1 // pred_fallthru
      _
    // Predicated region
    $region6: #{tpu_custom_call.1} parent=1 // pred_check
      _
    $region7: #{tpu_custom_call.1} parent=1 // pred_check_branch
      %22 = sbr.rel (0) target = $region9
    $region8: #{tpu_custom_call.1} parent=1 // pred_region
      %s24 = ssub.s32 256, 256
      %25 = vsyncadd [#allocation6], %s24
      %s26 = sshll.u32 [#allocation5], 4
      %s27 = int_to_ptr.vmem [resolvable:$true] %s26
      %32 = dma.hbm_to_vmem [thread:$0]  %s1, 256, %s27, [#allocation6], 64, 64, 4
    $region9: #{tpu_custom_call.1} parent=1 // pred_fallthru
      _
    // Predicated region
    $region10: #{tpu_custom_call.1} parent=1 // pred_check
      _
    $region11: #{tpu_custom_call.1} parent=1 // pred_check_branch
      %34 = sbr.rel (0) target = $region13
    $region12: #{tpu_custom_call.1} parent=1 // pred_region
      _
    $region13: #{tpu_custom_call.1} parent=1 // pred_fallthru
      _
    // Predicated region
    $region14: #{tpu_custom_call.1} parent=1 // pred_check
      _
    $region15: #{tpu_custom_call.1} parent=1 // pred_check_branch
      %36 = sbr.rel (0) target = $region17
    $region16: #{tpu_custom_call.1} parent=1 // pred_region
      %37 = dma.done [#allocation3], 128
    $region17: #{tpu_custom_call.1} parent=1 // pred_fallthru
      _
    // Predicated region
    $region18: #{tpu_custom_call.1} parent=1 // pred_check
      _
    $region19: #{tpu_custom_call.1} parent=1 // pred_check_branch
      %39 = sbr.rel (0) target = $region21
    $region20: #{tpu_custom_call.1} parent=1 // pred_region
      %40 = dma.done [#allocation6], 256
    $region21: #{tpu_custom_call.1} parent=1 // pred_fallthru
      _
    %v42 = vld [vmem:[#allocation2] sm:$0xff]
    %v43 = vpack.c.bf16 %v42, %v42
    %v44 = vld [vmem:[#allocation5] sm:$0xf]
    %v45 = vld [vmem:[#allocation5 + $0x4] sm:$0xf]
    %v46 = vld [vmem:[#allocation5 + $0x8] sm:$0xf]
    %v47 = vld [vmem:[#allocation5 + $0xc] sm:$0xf]
    %v48 = vld [vmem:[%s2] sm:$0x1]
    %v50 = vlaneseq
    %v51 = vshrl.u32 %v50, 7
    %v52 = vsub.s32 0, %v51
    %v53 = vrot.slane %v48, %v52
    %v59 = vunpack.c.l.b16 %v44
    %v60 = vunpack.c.l.b16 %v45
    %v61 = vunpack.c.l.b16 %v46
    %v62 = vunpack.c.l.b16 %v47
    %v63 = vpack.c.b16 %v60, %v59
    %v64 = vpack.c.b16 %v62, %v61
    %vm67 = vcmask 261120
    %v69 = vsel %vm67, %v43, 0
    %71 = vmatprep.subr.bf16.mxu0 0
    %72 = vmatpush1.bf16.msra.mxu0 %v63
    %73 = vmatprep.subr.bf16.mxu0 0
    %74 = vmatpush1.bf16.msra.mxu0 %v64
    %75 = vmatprep.subr.bf16.mxu0 0
    %76 = vmatpush1.bf16.msra.mxu0 0
    %77 = vmatprep.subr.bf16.mxu0 0
    %78 = vmatpush1.bf16.msra.mxu0 0
    %79 = vmatprep.subr.bf16.mxu0 0
    %80 = vmatpush1.bf16.msra.mxu0 0
    %81 = vmatprep.subr.bf16.mxu0 0
    %82 = vmatpush1.bf16.msra.mxu0 0
    %83 = vmatprep.subr.bf16.mxu0 0
    %84 = vmatpush1.bf16.msra.mxu0 0
    %85 = vmatprep.subr.bf16.mxu0 0
    %86 = vmatpush1.bf16.msra.mxu0 0
    %87 = vmatprep.subr.bf16.mxu0 0
    %88 = vmatpush1.bf16.msra.mxu0 0
    %89 = vmatprep.subr.bf16.mxu0 0
    %90 = vmatpush1.bf16.msra.mxu0 0
    %91 = vmatprep.subr.bf16.mxu0 0
    %92 = vmatpush1.bf16.msra.mxu0 0
    %93 = vmatprep.subr.bf16.mxu0 0
    %94 = vmatpush1.bf16.msra.mxu0 0
    %95 = vmatprep.subr.bf16.mxu0 0
    %96 = vmatpush1.bf16.msra.mxu0 0
    %97 = vmatprep.subr.bf16.mxu0 0
    %98 = vmatpush1.bf16.msra.mxu0 0
    %99 = vmatprep.subr.bf16.mxu0 0
    %100 = vmatpush1.bf16.msra.mxu0 0
    %101 = vmatprep.subr.bf16.mxu0 0
    %102 = vmatpush1.bf16.msra.mxu0 0
    %103 = vmatprep.mubr.bf16.mxu0 0
    %104 = vmatmul.mubr.bf16.gmra.mrb[0].mxu0 %v69
    %v105 = vpop.f32.mrb[0].mxu0
    %v106 = vadd.f32 %v53, %v105
    %v107 = vpop.f32.mrb[0].mxu0
    %v108 = vpop.f32.mrb[0].mxu0
    %v109 = vpop.f32.mrb[0].mxu0
    %110 = vdwg.mxu0
    %111 = vst [vmem:[#allocation7] sm:$0xff] %v106
    // Predicated region
    $region22: #{tpu_custom_call.1} parent=1 // pred_check
      _
    $region23: #{tpu_custom_call.1} parent=1 // pred_check_branch
      %113 = sbr.rel (0) target = $region25
    $region24: #{tpu_custom_call.1} parent=1 // pred_region
      %s115 = ssub.s32 128, 128
      %116 = vsyncadd [#allocation4], %s115
      %s118 = sshll.u32 [#allocation7], 4
      %s119 = int_to_ptr.vmem [resolvable:$true] %s118
      %121 = dma.vmem_to_hbm [thread:$0]  %s119, 128, %s3, [#allocation4]
    $region25: #{tpu_custom_call.1} parent=1 // pred_fallthru
      _
    // Predicated region
    $region26: #{tpu_custom_call.1} parent=1 // pred_check
      _
    $region27: #{tpu_custom_call.1} parent=1 // pred_check_branch
      %123 = sbr.rel (0) target = $region29
    $region28: #{tpu_custom_call.1} parent=1 // pred_region
      %124 = dma.done [#allocation4], 128
    $region29: #{tpu_custom_call.1} parent=1 // pred_fallthru
      _
    %125 = vsyncpa [#allocation3], 1
    %126 = vsyncpa [#allocation6], 1
    %127 = vsyncpa [#allocation4], 1

</llo_original>
